<compile_context>
chip_gen: v5e
topology: v5e:2x2
jax: 0.10.0
libtpu: 0.0.40
codegen_flags: <defaults>
</compile_context>

<pallas_src>
import jax
import jax.numpy as jnp
import numpy as np
from jax.experimental import pallas as pl
from jax.experimental.pallas import tpu as pltpu


def _round_up(x, m):
    return ((x + m - 1) // m) * m


def _cdiv(a, b):
    return -(-a // b)


def _sublane(dtype):
    # sublane packing: 8 rows for 32-bit, 16 for bf16, 32 for int8/fp8
    return max(8, 32 // jnp.dtype(dtype).itemsize)


def _vmem_capacity_bytes():
    try:
        cap = getattr(pltpu.get_tpu_info(), "vmem_capacity_bytes", None)
        if cap:
            return int(cap)
    except Exception:
        pass
    return 64 << 20  # v7x per-TensorCore VMEM (smallest across v5e/v6e/v7x)


def _resident_spec(shape, index_map):
    # Constant-index (resident) block: single-buffer it; the default
    # double-buffer would be pure VMEM waste for a block that never changes.
    try:
        return pl.BlockSpec(shape, index_map, pipeline_mode=pl.Buffered(1))
    except Exception:
        return pl.BlockSpec(shape, index_map)


def _dense_decomp_kernel(x_ref, w1t_ref, w2t_ref, o_ref, h_ref):
    # x_ref  : (TM, D_in_p)   compute dtype (batch tile)
    # w1t_ref: (D_in_p, K_p)  compute dtype ((S @ Vh)^T, zero-padded, resident)
    # w2t_ref: (K_p, TN)      compute dtype (U^T tile, zero-padded)
    # o_ref  : (TM, TN)       output dtype
    # h_ref  : (TM, K_p)      compute-dtype VMEM scratch; persists across the
    #                         D_out grid axis so the first matmul runs once per
    #                         batch tile even when D_out is tiled.
    @pl.when(pl.program_id(1) == 0)
    def _():
        h = jnp.dot(x_ref[...], w1t_ref[...], preferred_element_type=jnp.float32)
        h_ref[...] = jnp.maximum(h, 0.0).astype(h_ref.dtype)   # ReLU on VPU

    y = jnp.dot(h_ref[...], w2t_ref[...], preferred_element_type=jnp.float32)
    o_ref[...] = y.astype(o_ref.dtype)


def make_dense_decomp_ae(w1, w2, *, compute_dtype=jnp.bfloat16):
    """Build forward(x) = relu(x @ w1^T) @ w2^T.

    w1: (latent_dim, in_features)  == S @ Vh  (self.weight)
    w2: (out_features, latent_dim) == U       (self.weight_o)
    """
    K, D_in = w1.shape
    D_out, K2 = w2.shape
    assert K == K2
    itm = jnp.dtype(compute_dtype).itemsize

    D_in_p = _round_up(D_in, 128)
    K_p = _round_up(K, 128)
    D_out_p = _round_up(D_out, 128)

    # One-time layout plumbing: transpose + lane-pad weights at the JAX level so
    # the kernel issues plain (M,K)x(K,N) MXU matmuls on lane-dense tiles.
    # Zero-padding is mathematically neutral through the ReLU.
    w1t = jnp.zeros((D_in_p, K_p), compute_dtype).at[:D_in, :K].set(
        w1.T.astype(compute_dtype))
    w2t = jnp.zeros((K_p, D_out_p), compute_dtype).at[:K, :D_out].set(
        w2.T.astype(compute_dtype))

    vmem_cap = _vmem_capacity_bytes()
    budget = min(int(vmem_cap * 0.6), 96 << 20)

    @jax.jit
    def forward(x):
        B, d_in = x.shape
        assert d_in == D_in
        out_dtype = x.dtype
        out_itm = jnp.dtype(out_dtype).itemsize
        sub = _sublane(compute_dtype)

        # ---- batch tile: >=2 grid steps when B allows, >=128 MXU-friendly rows,
        #      capped at 1024 (tile-size returns saturate around 512-1024). -----
        tm_full = _round_up(B, sub)
        if tm_full >= 256:
            tm = min(max(128, _round_up(_cdiv(B, 4), sub)), 1024)
        else:
            tm = tm_full
        min_tm = min(tm, 128)

        def footprint(tm_, tn_):
            w1_b = D_in_p * K_p * itm                       # resident, 1 buffer
            w2_b = K_p * tn_ * itm * (1 if tn_ == D_out_p else 2)
            x_b = 2 * tm_ * D_in_p * itm                    # double-buffered input
            o_b = 2 * tm_ * tn_ * out_itm                   # double-buffered output
            h_b = tm_ * K_p * itm                           # h scratch
            interm = tm_ * K_p * 4 + tm_ * tn_ * 4          # f32 matmul accumulators
            return w1_b + w2_b + x_b + o_b + h_b + interm

        while tm > min_tm and footprint(tm, D_out_p) > budget:
            tm = max(_round_up(tm // 2, sub), min_tm)

        # Still over budget -> tile D_out instead of starving the MXU with tiny tm.
        tn = D_out_p
        if footprint(tm, tn) > budget:
            q = D_out_p // 128
            for d in sorted((d for d in range(1, q + 1) if q % d == 0), reverse=True):
                tn = 128 * d
                if footprint(tm, tn) <= budget:
                    break

        B_p = _round_up(B, tm)
        grid = (B_p // tm, D_out_p // tn)

        # ---- x: pad/cast only when actually needed (saves an HBM pass) --------
        if (B_p, D_in_p) == (B, D_in) and x.dtype == compute_dtype:
            x_in = x
        elif D_in_p == D_in:
            x_in = jnp.pad(x.astype(compute_dtype), ((0, B_p - B), (0, 0)))
        else:
            x_in = jnp.zeros((B_p, D_in_p), compute_dtype).at[:B, :D_in].set(
                x.astype(compute_dtype))

        vmem_limit = int(min(max(footprint(tm, tn) + (8 << 20), 32 << 20),
                             int(vmem_cap * 0.9)))
        flops = 2 * B_p * D_in_p * K_p + 2 * B_p * K_p * D_out_p
        bytes_accessed = (B_p * D_in_p * itm + D_in_p * K_p * itm
                          + K_p * D_out_p * itm + B_p * D_out_p * out_itm)

        w2_spec = (_resident_spec((K_p, D_out_p), lambda i, j: (0, 0))
                   if tn == D_out_p
                   else pl.BlockSpec((K_p, tn), lambda i, j: (0, j)))

        out_p = pl.pallas_call(
            _dense_decomp_kernel,
            out_shape=jax.ShapeDtypeStruct((B_p, D_out_p), out_dtype),
            grid=grid,
            in_specs=[
                pl.BlockSpec((tm, D_in_p), lambda i, j: (i, 0)),     # x: batch-tiled
                _resident_spec((D_in_p, K_p), lambda i, j: (0, 0)),  # w1t: resident
                w2_spec,                                             # w2t
            ],
            out_specs=pl.BlockSpec((tm, tn), lambda i, j: (i, j)),
            scratch_shapes=[pltpu.VMEM((tm, K_p), compute_dtype)],
            compiler_params=pltpu.CompilerParams(
                # batch axis megacore-shardable; D_out axis carries the h scratch.
                dimension_semantics=("parallel", "arbitrary"),
                vmem_limit_bytes=vmem_limit,
            ),
            cost_estimate=pl.CostEstimate(
                flops=int(flops), transcendentals=0,
                bytes_accessed=int(bytes_accessed)),
        )(x_in, w1t, w2t)

        if (B_p, D_out_p) == (B, D_out):
            return out_p
        return out_p[:B, :D_out]

    return forward
    # TODO(synk): self.bnorm (BatchNorm1d) exists in __init__ but is never applied
    # in forward(), so it is intentionally not implemented.


def build_params(key, out_features, in_features, latent_dim):
    """Mimic DenseDecompAE.__init__: SVD-decompose a dense weight matrix."""
    weight = jax.random.normal(key, (out_features, in_features), dtype=jnp.float32)
    U, S, Vh = np.linalg.svd(np.asarray(weight), full_matrices=False)
    U_k = U[:, :latent_dim]                      # (out_features, latent_dim)
    S_k = S[:latent_dim]                         # (latent_dim,)
    Vh_k = Vh[:latent_dim, :]                    # (latent_dim, in_features)
    w1 = S_k[:, None] * Vh_k                     # S @ Vh -> self.weight
    w2 = U_k                                     # U      -> self.weight_o
    return jnp.asarray(w1, jnp.float32), jnp.asarray(w2, jnp.float32)


if __name__ == "__main__":
    key = jax.random.PRNGKey(0)
    k_w, k_x = jax.random.split(key)

    batch = 8
    in_features = 32
    out_features = 32
    latent_dim = 8

    w1, w2 = build_params(k_w, out_features, in_features, latent_dim)
    x = jax.random.normal(k_x, (batch, in_features), dtype=jnp.float32)

    # Reference (plain JAX).
    y_ref = jnp.maximum(x @ w1.T, 0.0) @ w2.T

    # f32 path: tight check.
    fwd_f32 = make_dense_decomp_ae(w1, w2, compute_dtype=jnp.float32)
    y = jax.block_until_ready(fwd_f32(x))
    np.testing.assert_allclose(np.asarray(y), np.asarray(y_ref), rtol=1e-5, atol=1e-5)

    # bf16 compute / f32 accumulate (default production path): loose check.
    fwd_bf16 = make_dense_decomp_ae(w1, w2)
    y_bf16 = jax.block_until_ready(fwd_bf16(x))
    np.testing.assert_allclose(np.asarray(y_bf16), np.asarray(y_ref),
                               rtol=5e-2, atol=5e-1)

    print("KERNEL_OK")
</pallas_src>

<mosaic_0001>
module attributes {stable_mosaic.version = 11 : i64} {
  func.func @_dense_decomp_kernel(%arg0: i32, %arg1: i32, %arg2: memref<8x128xf32, #tpu.memory_space<vmem>>, %arg3: memref<128x128xf32, #tpu.memory_space<vmem>>, %arg4: memref<128x128xf32, #tpu.memory_space<vmem>>, %arg5: memref<8x128xf32, #tpu.memory_space<vmem>>, %arg6: memref<8x128xf32, #tpu.memory_space<vmem>>) attributes {dimension_semantics = [#tpu.dimension_semantics<parallel>, #tpu.dimension_semantics<arbitrary>], iteration_bounds = array<i64: 1, 1>, scalar_prefetch = 0 : i64, scratch_operands = 1 : i64, tpu.core_type = #tpu.core_type<tc>, window_params = [{transform_indices = @transform_0, window_bounds = array<i64: 8, 128>}, {pipeline_mode = #tpu.pipeline_mode<synchronous>, transform_indices = @transform_1, window_bounds = array<i64: 128, 128>}, {pipeline_mode = #tpu.pipeline_mode<synchronous>, transform_indices = @transform_2, window_bounds = array<i64: 128, 128>}, {transform_indices = @transform_3, window_bounds = array<i64: 8, 128>}]} {
    %c0_i32 = arith.constant 0 : i32
    %0 = arith.cmpi eq, %arg1, %c0_i32 : i32
    %1 = arith.extui %0 : i1 to i32
    %c0_i32_0 = arith.constant 0 : i32
    %2 = arith.cmpi ne, %1, %c0_i32_0 : i32
    scf.if %2 {
      %c0_6 = arith.constant 0 : index
      %c0_7 = arith.constant 0 : index
      %7 = vector.load %arg2[%c0_6, %c0_7] : memref<8x128xf32, #tpu.memory_space<vmem>>, vector<8x128xf32>
      %c0_8 = arith.constant 0 : index
      %c0_9 = arith.constant 0 : index
      %8 = vector.load %arg3[%c0_8, %c0_9] : memref<128x128xf32, #tpu.memory_space<vmem>>, vector<128x128xf32>
      %cst_10 = arith.constant dense<0.000000e+00> : vector<8x128xf32>
      %9 = tpu.matmul %7, %8, %cst_10 {dimension_numbers = #tpu.dot_dimension_numbers<[1], [0], [0], [1], [0, 0, 1, 1], [], []>} : vector<8x128xf32>, vector<128x128xf32>, vector<8x128xf32> -> vector<8x128xf32>
      %cst_11 = arith.constant 0.000000e+00 : f32
      %10 = vector.broadcast %cst_11 : f32 to vector<8x128xf32>
      %11 = arith.maximumf %9, %10 : vector<8x128xf32>
      %c0_12 = arith.constant 0 : index
      %c0_13 = arith.constant 0 : index
      %12 = vector.load %arg6[%c0_12, %c0_13] : memref<8x128xf32, #tpu.memory_space<vmem>>, vector<8x128xf32>
      tpu.vector_store %arg6[%c0_12, %c0_13], %11 {strides = array<i32>} : memref<8x128xf32, #tpu.memory_space<vmem>>, vector<8x128xf32>,
    } else {
    }
    %c0 = arith.constant 0 : index
    %c0_1 = arith.constant 0 : index
    %3 = vector.load %arg6[%c0, %c0_1] : memref<8x128xf32, #tpu.memory_space<vmem>>, vector<8x128xf32>
    %c0_2 = arith.constant 0 : index
    %c0_3 = arith.constant 0 : index
    %4 = vector.load %arg4[%c0_2, %c0_3] : memref<128x128xf32, #tpu.memory_space<vmem>>, vector<128x128xf32>
    %cst = arith.constant dense<0.000000e+00> : vector<8x128xf32>
    %5 = tpu.matmul %3, %4, %cst {dimension_numbers = #tpu.dot_dimension_numbers<[1], [0], [0], [1], [0, 0, 1, 1], [], []>} : vector<8x128xf32>, vector<128x128xf32>, vector<8x128xf32> -> vector<8x128xf32>
    %c0_4 = arith.constant 0 : index
    %c0_5 = arith.constant 0 : index
    %6 = vector.load %arg5[%c0_4, %c0_5] : memref<8x128xf32, #tpu.memory_space<vmem>>, vector<8x128xf32>
    tpu.vector_store %arg5[%c0_4, %c0_5], %5 {strides = array<i32>} : memref<8x128xf32, #tpu.memory_space<vmem>>, vector<8x128xf32>,
    return
  }
  func.func @transform_0(%arg0: i32, %arg1: i32) -> (i32, i32) {
    %c0_i32 = arith.constant 0 : i32
    %c0_i32_0 = arith.constant 0 : i32
    return %arg0, %c0_i32 : i32, i32
  }
  func.func @transform_1(%arg0: i32, %arg1: i32) -> (i32, i32) {
    %c0_i32 = arith.constant 0 : i32
    %c0_i32_0 = arith.constant 0 : i32
    %c0_i32_1 = arith.constant 0 : i32
    return %c0_i32, %c0_i32_0 : i32, i32
  }
  func.func @transform_2(%arg0: i32, %arg1: i32) -> (i32, i32) {
    %c0_i32 = arith.constant 0 : i32
    %c0_i32_0 = arith.constant 0 : i32
    %c0_i32_1 = arith.constant 0 : i32
    return %c0_i32, %c0_i32_0 : i32, i32
  }
  func.func @transform_3(%arg0: i32, %arg1: i32) -> (i32, i32) {
    %c0_i32 = arith.constant 0 : i32
    return %arg0, %arg1 : i32, i32
  }
}

</mosaic_0001>

<llo_original>
// kernel: forward.1
$region0: #{forward.1}
  #allocation0 [shape = 'u32[]', space=smem, size = 0x4, offset = 0x4, fixed_abs, tag = 'smem constant byte address 0x4 - core index']
  #allocation1 [shape = 'u32[72,128]{1,0:T(1,128)}', space=vmem, size = 0x9000, scoped, tag = 'internal scratch']
  #allocation2 [shape = 'f32[8,128]{1,0:T(8,128)}', space=vmem, size = 0x1000, scoped, tag = 'scratch operand']
  %s0 = inlined_call_operand.vmem [shape: f32[8,128], index: 0, kind: input, shape index: {}]
  %s1 = inlined_call_operand.hbm [shape: f32[128,128], index: 1, kind: input, shape index: {}]
  %s2 = inlined_call_operand.hbm [shape: f32[128,128], index: 2, kind: input, shape index: {}]
  %s3 = inlined_call_operand.hbm [shape: f32[8,128], index: 3, kind: output, shape index: {}]
  %s4 = sld [smem:[#allocation0]]
  $region34: #{forward.1} parent=0
    _
  %s6 = ssub.s32 1, %s4
  %s7 = scalar_select 0, %s6, %s4
  $region1: #{forward.1} parent=0
    #allocation3 [shape = 'u8[65536]{0}', space=vmem, size = 0x10000, scoped, tag = 'input window, operand 1, single buffered']
    #allocation4 [shape = 's32[1]{0}', space=sflag, size = 0x4, scoped, tag = 'scoped memory for forward.1']
    #allocation5 [shape = 's32[1]{0}', space=sflag, size = 0x4, scoped, tag = 'scoped memory for forward.1']
    #allocation6 [shape = 'u8[65536]{0}', space=vmem, size = 0x10000, scoped, tag = 'input window, operand 2, single buffered']
    #allocation7 [shape = 's32[1]{0}', space=sflag, size = 0x4, scoped, tag = 'scoped memory for forward.1']
    #allocation8 [shape = 'u8[4096]{0}', space=vmem, size = 0x1000, scoped, tag = 'output window, operand 0, single buffered']
    %8 = vsyncpa [#allocation4], 0
    %9 = vsyncpa [#allocation7], 0
    %10 = vsyncpa [#allocation5], 0
    // Predicated region
    $region2: #{forward.1} parent=1 // pred_check
      _
    $region3: #{forward.1} parent=1 // pred_check_branch
      %12 = sbr.rel (0) target = $region5
    $region4: #{forward.1} parent=1 // pred_region
      _
    $region5: #{forward.1} parent=1 // pred_fallthru
      _
    // Predicated region
    $region6: #{forward.1} parent=1 // pred_check
      _
    $region7: #{forward.1} parent=1 // pred_check_branch
      %14 = sbr.rel (0) target = $region9
    $region8: #{forward.1} parent=1 // pred_region
      %16 = vsyncadd [#allocation4], 0
      %s17 = sshll.u32 %s1, 4
      %s18 = int_to_ptr.hbm [resolvable:$true] %s17
      %s19 = sshll.u32 [#allocation3], 4
      %s20 = int_to_ptr.vmem [resolvable:$true] %s19
      %25 = dma.hbm_to_vmem [thread:$0]  %s18, 2048, %s20, [#allocation4], 128, 128, 8
    $region9: #{forward.1} parent=1 // pred_fallthru
      _
    // Predicated region
    $region10: #{forward.1} parent=1 // pred_check
      _
    $region11: #{forward.1} parent=1 // pred_check_branch
      %27 = sbr.rel (0) target = $region13
    $region12: #{forward.1} parent=1 // pred_region
      %29 = vsyncadd [#allocation7], 0
      %s30 = sshll.u32 %s2, 4
      %s31 = int_to_ptr.hbm [resolvable:$true] %s30
      %s32 = sshll.u32 [#allocation6], 4
      %s33 = int_to_ptr.vmem [resolvable:$true] %s32
      %38 = dma.hbm_to_vmem [thread:$0]  %s31, 2048, %s33, [#allocation7], 128, 128, 8
    $region13: #{forward.1} parent=1 // pred_fallthru
      _
    // Predicated region
    $region14: #{forward.1} parent=1 // pred_check
      _
    $region15: #{forward.1} parent=1 // pred_check_branch
      %40 = sbr.rel (0) target = $region17
    $region16: #{forward.1} parent=1 // pred_region
      %42 = dma.done [#allocation4], 2048
    $region17: #{forward.1} parent=1 // pred_fallthru
      _
    // Predicated region
    $region18: #{forward.1} parent=1 // pred_check
      _
    $region19: #{forward.1} parent=1 // pred_check_branch
      %44 = sbr.rel (0) target = $region21
    $region20: #{forward.1} parent=1 // pred_region
      %46 = dma.done [#allocation7], 2048
    $region21: #{forward.1} parent=1 // pred_fallthru
      _
    %p47 = scmp.eq.s32.totalorder 0, 0
    // Predicated region
    $region22: #{forward.1} parent=1 // pred_check
      %p48 = pneg %p47
    $region23: #{forward.1} parent=1 // pred_check_branch
      %50 = sbr.rel (%p48) target = $region25
    $region24: #{forward.1} parent=1 // pred_region
      %v51 = vld [vmem:[%s0] sm:$0xff]
      %v52 = vld [vmem:[#allocation3] sm:$0xff]
      %v53 = vld [vmem:[#allocation3 + $0x8] sm:$0xff]
      %v54 = vld [vmem:[#allocation3 + $0x10] sm:$0xff]
      %v55 = vld [vmem:[#allocation3 + $0x18] sm:$0xff]
      %v56 = vld [vmem:[#allocation3 + $0x20] sm:$0xff]
      %v57 = vld [vmem:[#allocation3 + $0x28] sm:$0xff]
      %v58 = vld [vmem:[#allocation3 + $0x30] sm:$0xff]
      %v59 = vld [vmem:[#allocation3 + $0x38] sm:$0xff]
      %v60 = vld [vmem:[#allocation3 + $0x40] sm:$0xff]
      %v61 = vld [vmem:[#allocation3 + $0x48] sm:$0xff]
      %v62 = vld [vmem:[#allocation3 + $0x50] sm:$0xff]
      %v63 = vld [vmem:[#allocation3 + $0x58] sm:$0xff]
      %v64 = vld [vmem:[#allocation3 + $0x60] sm:$0xff]
      %v65 = vld [vmem:[#allocation3 + $0x68] sm:$0xff]
      %v66 = vld [vmem:[#allocation3 + $0x70] sm:$0xff]
      %v67 = vld [vmem:[#allocation3 + $0x78] sm:$0xff]
      %68 = vmatpush.msra.mxu0 %v67
      %69 = vmatpush.msra.mxu0 %v66
      %70 = vmatpush.msra.mxu0 %v65
      %71 = vmatpush.msra.mxu0 %v64
      %72 = vmatpush.msra.mxu0 %v63
      %73 = vmatpush.msra.mxu0 %v62
      %74 = vmatpush.msra.mxu0 %v61
      %75 = vmatpush.msra.mxu0 %v60
      %76 = vmatpush.msra.mxu0 %v59
      %77 = vmatpush.msra.mxu0 %v58
      %78 = vmatpush.msra.mxu0 %v57
      %79 = vmatpush.msra.mxu0 %v56
      %80 = vmatpush.msra.mxu0 %v55
      %81 = vmatpush.msra.mxu0 %v54
      %82 = vmatpush.msra.mxu0 %v53
      %83 = vmatpush.msra.mxu0 %v52
      %84 = vmatmul.f32.gmra.mxu0 %v51
      %v85 = vpop.f32.mrf.mxu0
      %v86 = vadd.f32 0.0, %v85
      %87 = vdwg.mxu0
      %v88 = vmax.f32 %v86, 0.0
      %89 = vst [vmem:[#allocation2] sm:$0xff] %v88
    $region25: #{forward.1} parent=1 // pred_fallthru
      _
    %v90 = vld [vmem:[#allocation2] sm:$0xff]
    %v91 = vld [vmem:[#allocation6] sm:$0xff]
    %v92 = vld [vmem:[#allocation6 + $0x8] sm:$0xff]
    %v93 = vld [vmem:[#allocation6 + $0x10] sm:$0xff]
    %v94 = vld [vmem:[#allocation6 + $0x18] sm:$0xff]
    %v95 = vld [vmem:[#allocation6 + $0x20] sm:$0xff]
    %v96 = vld [vmem:[#allocation6 + $0x28] sm:$0xff]
    %v97 = vld [vmem:[#allocation6 + $0x30] sm:$0xff]
    %v98 = vld [vmem:[#allocation6 + $0x38] sm:$0xff]
    %v99 = vld [vmem:[#allocation6 + $0x40] sm:$0xff]
    %v100 = vld [vmem:[#allocation6 + $0x48] sm:$0xff]
    %v101 = vld [vmem:[#allocation6 + $0x50] sm:$0xff]
    %v102 = vld [vmem:[#allocation6 + $0x58] sm:$0xff]
    %v103 = vld [vmem:[#allocation6 + $0x60] sm:$0xff]
    %v104 = vld [vmem:[#allocation6 + $0x68] sm:$0xff]
    %v105 = vld [vmem:[#allocation6 + $0x70] sm:$0xff]
    %v106 = vld [vmem:[#allocation6 + $0x78] sm:$0xff]
    %107 = vmatpush.msra.mxu0 %v106
    %108 = vmatpush.msra.mxu0 %v105
    %109 = vmatpush.msra.mxu0 %v104
    %110 = vmatpush.msra.mxu0 %v103
    %111 = vmatpush.msra.mxu0 %v102
    %112 = vmatpush.msra.mxu0 %v101
    %113 = vmatpush.msra.mxu0 %v100
    %114 = vmatpush.msra.mxu0 %v99
    %115 = vmatpush.msra.mxu0 %v98
    %116 = vmatpush.msra.mxu0 %v97
    %117 = vmatpush.msra.mxu0 %v96
    %118 = vmatpush.msra.mxu0 %v95
    %119 = vmatpush.msra.mxu0 %v94
    %120 = vmatpush.msra.mxu0 %v93
    %121 = vmatpush.msra.mxu0 %v92
    %122 = vmatpush.msra.mxu0 %v91
    %123 = vmatmul.f32.gmra.mxu0 %v90
    %v124 = vpop.f32.mrf.mxu0
    %v125 = vadd.f32 0.0, %v124
    %126 = vdwg.mxu0
    %127 = vst [vmem:[#allocation8] sm:$0xff] %v125
    // Predicated region
    $region26: #{forward.1} parent=1 // pred_check
      _
    $region27: #{forward.1} parent=1 // pred_check_branch
      %129 = sbr.rel (0) target = $region29
    $region28: #{forward.1} parent=1 // pred_region
      %131 = vsyncadd [#allocation5], 0
      %s133 = sshll.u32 [#allocation8], 4
      %s134 = int_to_ptr.vmem [resolvable:$true] %s133
      %s135 = sshll.u32 %s3, 4
      %s136 = int_to_ptr.hbm [resolvable:$true] %s135
      %138 = dma.vmem_to_hbm [thread:$0]  %s134, 128, %s136, [#allocation5]
    $region29: #{forward.1} parent=1 // pred_fallthru
      _
    // Predicated region
    $region30: #{forward.1} parent=1 // pred_check
      _
    $region31: #{forward.1} parent=1 // pred_check_branch
      %140 = sbr.rel (0) target = $region33
    $region32: #{forward.1} parent=1 // pred_region
      %142 = dma.done [#allocation5], 128
    $region33: #{forward.1} parent=1 // pred_fallthru
      _
    %143 = vsyncpa [#allocation4], 1
    %144 = vsyncpa [#allocation7], 1
    %145 = vsyncpa [#allocation5], 1

</llo_original>
